<compile_context>
chip_gen: v6e
topology: v6e:2x2x1
jax: 0.10.0
libtpu: 0.0.40
codegen_flags: <defaults>
</compile_context>

<pallas_src>
import jax
import jax.numpy as jnp
from jax.experimental import pallas as pl
from jax.experimental.pallas import tpu as pltpu

EPS = 1e-5  # nn.LayerNorm default


def _patch_reverse_merge_kernel(x_ref, gamma_ref, beta_ref, w_ref, o_ref):
    # o_ref block: (R, 2, W, 2*out_dim);  x_ref block: (R*W, C)
    rows, _, width, half = o_ref.shape

    # ---- LayerNorm (f32, one-pass variance) ----
    x = x_ref[...].astype(jnp.float32)                        # (R*W, C)
    mean = jnp.mean(x, axis=-1, keepdims=True)
    meansq = jnp.mean(x * x, axis=-1, keepdims=True)
    var = jnp.maximum(meansq - mean * mean, 0.0)
    xn = (x - mean) * jax.lax.rsqrt(var + EPS)
    xn = xn * gamma_ref[...] + beta_ref[...]                   # (1,C) broadcast

    # ---- Linear on the MXU: bf16 inputs, f32 accumulation ----
    y = jnp.dot(xn.astype(jnp.bfloat16), w_ref[...],
                preferred_element_type=jnp.float32)            # (R*W, 4*out_dim)
    y = y.astype(o_ref.dtype)

    # ---- fused PixelShuffle scatter ----
    # Weight columns were permuted host-side so that:
    #   y[:, :half]  -> output rows 2h   (i = 0)
    #   y[:, half:]  -> output rows 2h+1 (i = 1)
    # and within a half, column j*out_dim + c lands at out[..., 2w+j, c].
    o_ref[:, 0, :, :] = y[:, :half].reshape(rows, width, half)
    o_ref[:, 1, :, :] = y[:, half:].reshape(rows, width, half)


def _pick_row_tile(bh, w, max_tile_rows):
    """Largest divisor R of B*H with R*W <= max_tile_rows and R*W % 8 == 0
    (keeps the x-block sublane-aligned).  Falls back to the whole array."""
    max_r = max(1, int(max_tile_rows) // w)
    for r in range(min(bh, max_r), 0, -1):
        if bh % r == 0 and (r * w) % 8 == 0:
            return r
    # Fallback: single tile spanning everything (block == full array dims is
    # always a legal BlockSpec).  Only hit for tiny/awkward shapes.
    return bh


def patch_reverse_merging(x, gamma, beta, weight, *, input_resolution, out_dim,
                          max_tile_rows=512):
    """x: (B, H*W, C).  weight: (4*out_dim, C) as in nn.Linear (bias=False).
    gamma/beta: (C,) LayerNorm affine.  Returns (B, (2H)*(2W), out_dim),
    matching PatchReverseMerging.forward."""
    H, W = input_resolution
    B, L, C = x.shape
    assert L == H * W, "input feature has wrong size"
    assert H % 2 == 0 and W % 2 == 0, f"x size ({H}*{W}) are not even."

    D = out_dim
    N = 4 * D
    BH = B * H
    M = BH * W

    # ---- tiling: R complete (b, h) rows per grid step ----
    R = _pick_row_tile(BH, W, max_tile_rows)
    tile_rows = R * W
    grid = (BH // R,)

    x_flat = x.reshape(M, C)

    # ---- permute Linear weight columns so PixelShuffle becomes a reshape ----
    # original column n = 4c + 2i + j   ->   new column n' = i*2D + j*D + c
    wt = weight.T.reshape(C, D, 2, 2)                  # [:, c, i, j]
    w_perm = jnp.transpose(wt, (0, 2, 3, 1)).reshape(C, N).astype(jnp.bfloat16)

    gamma2 = gamma.reshape(1, C).astype(jnp.float32)
    beta2 = beta.reshape(1, C).astype(jnp.float32)

    out4 = pl.pallas_call(
        _patch_reverse_merge_kernel,
        out_shape=jax.ShapeDtypeStruct((BH, 2, W, 2 * D), x.dtype),
        grid_spec=pltpu.PrefetchScalarGridSpec(
            num_scalar_prefetch=0,
            grid=grid,
            in_specs=[
                pl.BlockSpec((tile_rows, C), lambda m: (m, 0)),
                pl.BlockSpec((1, C), lambda m: (0, 0)),
                pl.BlockSpec((1, C), lambda m: (0, 0)),
                # whole weight resident in VMEM once (no double-buffer copy)
                pl.BlockSpec(memory_space=pltpu.MemorySpace.VMEM),
            ],
            out_specs=pl.BlockSpec((R, 2, W, 2 * D), lambda m: (m, 0, 0, 0)),
        ),
        compiler_params=pltpu.CompilerParams(
            dimension_semantics=("parallel",),
            vmem_limit_bytes=48 * 1024 * 1024,
        ),
    )(x_flat, gamma2, beta2, w_perm)

    # (BH, 2, W, 2D) row-major is already the final layout -> free reshape.
    return out4.reshape(B, 4 * H * W, D)


def _reference(x, gamma, beta, weight, *, input_resolution, out_dim,
               matmul_dtype=jnp.float32):
    """Pure-JAX reference mirroring the PyTorch module exactly."""
    H, W = input_resolution
    B, L, C = x.shape
    mean = jnp.mean(x, axis=-1, keepdims=True)
    var = jnp.mean((x - mean) ** 2, axis=-1, keepdims=True)
    xn = (x - mean) / jnp.sqrt(var + EPS) * gamma + beta
    y = jnp.dot(xn.astype(matmul_dtype), weight.T.astype(matmul_dtype),
                preferred_element_type=jnp.float32).astype(x.dtype)
    y = y.reshape(B, H, W, 4 * out_dim)
    y = jnp.transpose(y, (0, 3, 1, 2))                          # NCHW
    # pixel shuffle r=2
    y = y.reshape(B, out_dim, 2, 2, H, W)
    y = jnp.transpose(y, (0, 1, 4, 2, 5, 3))                    # (B, D, H, 2, W, 2)
    y = y.reshape(B, out_dim, 2 * H, 2 * W)
    y = y.reshape(B, out_dim, 4 * H * W)
    return jnp.transpose(y, (0, 2, 1))                          # (B, 4HW, D)


if __name__ == "__main__":
    B, H, W = 2, 8, 8
    dim, out_dim = 32, 16

    key = jax.random.PRNGKey(0)
    kx, kw, kg, kb = jax.random.split(key, 4)
    x = jax.random.normal(kx, (B, H * W, dim), dtype=jnp.float32)
    weight = jax.random.normal(kw, (4 * out_dim, dim), dtype=jnp.float32) * 0.05
    gamma = 1.0 + 0.1 * jax.random.normal(kg, (dim,), dtype=jnp.float32)
    beta = 0.1 * jax.random.normal(kb, (dim,), dtype=jnp.float32)

    out = patch_reverse_merging(
        x, gamma, beta, weight, input_resolution=(H, W), out_dim=out_dim)
    out = jax.block_until_ready(out)
    assert out.shape == (B, 4 * H * W, out_dim), out.shape

    # Tight check vs a reference using the same bf16-matmul strategy
    # (validates the fused PixelShuffle / weight-permutation layout exactly).
    ref_bf16 = _reference(x, gamma, beta, weight, input_resolution=(H, W),
                          out_dim=out_dim, matmul_dtype=jnp.bfloat16)
    assert jnp.allclose(out, ref_bf16, atol=5e-3, rtol=5e-3), \
        "mismatch vs bf16-matmul reference"

    # Loose check vs the exact f32 PyTorch-mirror reference (bf16 MXU rounding).
    ref_f32 = _reference(x, gamma, beta, weight, input_resolution=(H, W),
                         out_dim=out_dim, matmul_dtype=jnp.float32)
    assert jnp.allclose(out, ref_f32, atol=3e-2, rtol=3e-2), \
        "mismatch vs f32 reference"

    print("KERNEL_OK")
</pallas_src>

<mosaic_0001>
module attributes {stable_mosaic.version = 11 : i64} {
  func.func @_patch_reverse_merge_kernel(%arg0: i32, %arg1: memref<128x32xf32, #tpu.memory_space<vmem>>, %arg2: memref<1x32xf32, #tpu.memory_space<vmem>>, %arg3: memref<1x32xf32, #tpu.memory_space<vmem>>, %arg4: memref<32x64xbf16, #tpu.memory_space<vmem>>, %arg5: memref<16x2x8x32xf32, #tpu.memory_space<vmem>>) attributes {dimension_semantics = [#tpu.dimension_semantics<parallel>], iteration_bounds = array<i64: 1>, scalar_prefetch = 0 : i64, scratch_operands = 0 : i64, tpu.core_type = #tpu.core_type<tc>, window_params = [{transform_indices = @transform_0, window_bounds = array<i64: 128, 32>}, {pipeline_mode = #tpu.pipeline_mode<synchronous>, transform_indices = @transform_1, window_bounds = array<i64: 1, 32>}, {pipeline_mode = #tpu.pipeline_mode<synchronous>, transform_indices = @transform_2, window_bounds = array<i64: 1, 32>}, {pipeline_mode = #tpu.pipeline_mode<synchronous>, transform_indices = @transform_3, window_bounds = array<i64: 32, 64>}, {transform_indices = @transform_4, window_bounds = array<i64: 16, 2, 8, 32>}]} {
    %c0 = arith.constant 0 : index
    %c0_0 = arith.constant 0 : index
    %0 = vector.load %arg1[%c0, %c0_0] : memref<128x32xf32, #tpu.memory_space<vmem>>, vector<128x32xf32>
    %cst = arith.constant dense<0.000000e+00> : vector<128xf32>
    %1 = vector.multi_reduction <add>, %0, %cst [1] : vector<128x32xf32> to vector<128xf32>
    %2 = vector.shape_cast %1 : vector<128xf32> to vector<128x1xf32>
    %cst_1 = arith.constant 3.200000e+01 : f32
    %3 = vector.broadcast %cst_1 : f32 to vector<128x1xf32>
    %4 = arith.divf %2, %3 : vector<128x1xf32>
    %5 = arith.mulf %0, %0 : vector<128x32xf32>
    %cst_2 = arith.constant dense<0.000000e+00> : vector<128xf32>
    %6 = vector.multi_reduction <add>, %5, %cst_2 [1] : vector<128x32xf32> to vector<128xf32>
    %7 = vector.shape_cast %6 : vector<128xf32> to vector<128x1xf32>
    %cst_3 = arith.constant 3.200000e+01 : f32
    %8 = vector.broadcast %cst_3 : f32 to vector<128x1xf32>
    %9 = arith.divf %7, %8 : vector<128x1xf32>
    %10 = arith.mulf %4, %4 : vector<128x1xf32>
    %11 = arith.subf %9, %10 : vector<128x1xf32>
    %cst_4 = arith.constant 0.000000e+00 : f32
    %12 = vector.broadcast %cst_4 : f32 to vector<128x1xf32>
    %13 = arith.maximumf %11, %12 : vector<128x1xf32>
    %14 = vector.broadcast %4 : vector<128x1xf32> to vector<128x32xf32>
    %15 = arith.subf %0, %14 : vector<128x32xf32>
    %cst_5 = arith.constant 9.99999974E-6 : f32
    %16 = vector.broadcast %cst_5 : f32 to vector<128x1xf32>
    %17 = arith.addf %13, %16 : vector<128x1xf32>
    %18 = math.rsqrt %17 : vector<128x1xf32>
    %19 = vector.broadcast %18 : vector<128x1xf32> to vector<128x32xf32>
    %20 = arith.mulf %15, %19 : vector<128x32xf32>
    %c0_6 = arith.constant 0 : index
    %c0_7 = arith.constant 0 : index
    %21 = vector.load %arg2[%c0_6, %c0_7] : memref<1x32xf32, #tpu.memory_space<vmem>>, vector<1x32xf32>
    %22 = vector.broadcast %21 : vector<1x32xf32> to vector<128x32xf32>
    %23 = arith.mulf %20, %22 : vector<128x32xf32>
    %c0_8 = arith.constant 0 : index
    %c0_9 = arith.constant 0 : index
    %24 = vector.load %arg3[%c0_8, %c0_9] : memref<1x32xf32, #tpu.memory_space<vmem>>, vector<1x32xf32>
    %25 = vector.broadcast %24 : vector<1x32xf32> to vector<128x32xf32>
    %26 = arith.addf %23, %25 : vector<128x32xf32>
    %27 = arith.truncf %26 : vector<128x32xf32> to vector<128x32xbf16>
    %c0_10 = arith.constant 0 : index
    %c0_11 = arith.constant 0 : index
    %28 = vector.load %arg4[%c0_10, %c0_11] : memref<32x64xbf16, #tpu.memory_space<vmem>>, vector<32x64xbf16>
    %cst_12 = arith.constant dense<0.000000e+00> : vector<128x64xf32>
    %29 = tpu.matmul %27, %28, %cst_12 {dimension_numbers = #tpu.dot_dimension_numbers<[1], [0], [0], [1], [0, 0, 1, 1], [], []>} : vector<128x32xbf16>, vector<32x64xbf16>, vector<128x64xf32> -> vector<128x64xf32>
    %30 = vector.extract_strided_slice %29 {offsets = [0, 0], sizes = [128, 32], strides = [1, 1]} : vector<128x64xf32> to vector<128x32xf32>
    %31 = vector.shape_cast %30 : vector<128x32xf32> to vector<16x8x32xf32>
    %c0_13 = arith.constant 0 : index
    %c0_14 = arith.constant 0 : index
    %c0_15 = arith.constant 0 : index
    %c0_16 = arith.constant 0 : index
    %32 = vector.load %arg5[%c0_13, %c0_14, %c0_15, %c0_16] : memref<16x2x8x32xf32, #tpu.memory_space<vmem>>, vector<16x1x8x32xf32>
    %33 = vector.shape_cast %32 : vector<16x1x8x32xf32> to vector<16x8x32xf32>
    %34 = vector.shape_cast %31 : vector<16x8x32xf32> to vector<16x1x8x32xf32>
    tpu.vector_store %arg5[%c0_13, %c0_14, %c0_15, %c0_16], %34 {strides = array<i32>} : memref<16x2x8x32xf32, #tpu.memory_space<vmem>>, vector<16x1x8x32xf32>,
    %35 = vector.extract_strided_slice %29 {offsets = [0, 32], sizes = [128, 32], strides = [1, 1]} : vector<128x64xf32> to vector<128x32xf32>
    %36 = vector.shape_cast %35 : vector<128x32xf32> to vector<16x8x32xf32>
    %c0_17 = arith.constant 0 : index
    %c1 = arith.constant 1 : index
    %c0_18 = arith.constant 0 : index
    %c0_19 = arith.constant 0 : index
    %37 = vector.load %arg5[%c0_17, %c1, %c0_18, %c0_19] : memref<16x2x8x32xf32, #tpu.memory_space<vmem>>, vector<16x1x8x32xf32>
    %38 = vector.shape_cast %37 : vector<16x1x8x32xf32> to vector<16x8x32xf32>
    %39 = vector.shape_cast %36 : vector<16x8x32xf32> to vector<16x1x8x32xf32>
    tpu.vector_store %arg5[%c0_17, %c1, %c0_18, %c0_19], %39 {strides = array<i32>} : memref<16x2x8x32xf32, #tpu.memory_space<vmem>>, vector<16x1x8x32xf32>,
    return
  }
  func.func @transform_0(%arg0: i32) -> (i32, i32) {
    %c0_i32 = arith.constant 0 : i32
    %c0_i32_0 = arith.constant 0 : i32
    return %arg0, %c0_i32 : i32, i32
  }
  func.func @transform_1(%arg0: i32) -> (i32, i32) {
    %c0_i32 = arith.constant 0 : i32
    %c0_i32_0 = arith.constant 0 : i32
    %c0_i32_1 = arith.constant 0 : i32
    return %c0_i32, %c0_i32_0 : i32, i32
  }
  func.func @transform_2(%arg0: i32) -> (i32, i32) {
    %c0_i32 = arith.constant 0 : i32
    %c0_i32_0 = arith.constant 0 : i32
    %c0_i32_1 = arith.constant 0 : i32
    return %c0_i32, %c0_i32_0 : i32, i32
  }
  func.func @transform_3(%arg0: i32) -> (i32, i32) {
    %c0_i32 = arith.constant 0 : i32
    %c0_i32_0 = arith.constant 0 : i32
    %c0_i32_1 = arith.constant 0 : i32
    return %c0_i32, %c0_i32_0 : i32, i32
  }
  func.func @transform_4(%arg0: i32) -> (i32, i32, i32, i32) {
    %c0_i32 = arith.constant 0 : i32
    %c0_i32_0 = arith.constant 0 : i32
    %c0_i32_1 = arith.constant 0 : i32
    %c0_i32_2 = arith.constant 0 : i32
    return %arg0, %c0_i32, %c0_i32_0, %c0_i32_1 : i32, i32, i32, i32
  }
}

</mosaic_0001>

<llo_original>
// kernel: tpu_custom_call.1
$region0: #{tpu_custom_call.1}
  #allocation0 [shape = 'u32[]', space=smem, size = 0x4, offset = 0x4, fixed_abs, tag = 'smem constant byte address 0x4 - core index']
  #allocation1 [shape = 'u32[144,128]{1,0:T(1,128)}', space=vmem, size = 0x12000, scoped, tag = 'internal scratch']
  %s0 = inlined_call_operand.vmem [shape: f32[128,32], index: 0, kind: input, shape index: {}]
  %s1 = inlined_call_operand.vmem [shape: f32[1,32], index: 1, kind: input, shape index: {}]
  %s2 = inlined_call_operand.vmem [shape: f32[1,32], index: 2, kind: input, shape index: {}]
  %s3 = inlined_call_operand.vmem [shape: bf16[32,64], index: 3, kind: input, shape index: {}]
  %s4 = inlined_call_operand.hbm [shape: f32[16,2,8,32], index: 4, kind: output, shape index: {}]
  %s5 = sld [smem:[#allocation0]]
  $region26: #{tpu_custom_call.1} parent=0
    _
  %s7 = ssub.s32 1, %s5
  %s8 = scalar_select 0, %s7, %s5
  $region1: #{tpu_custom_call.1} parent=0
    #allocation2 [shape = 'u8[131072]{0}', space=vmem, size = 0x20000, scoped, tag = 'output window, operand 0, single buffered']
    #allocation3 [shape = 's32[1]{0}', space=sflag, size = 0x4, scoped, tag = 'scoped memory for tpu_custom_call.1']
    %9 = vsyncpa [#allocation3], 0
    // Predicated region
    $region2: #{tpu_custom_call.1} parent=1 // pred_check
      _
    $region3: #{tpu_custom_call.1} parent=1 // pred_check_branch
      %11 = sbr.rel (0) target = $region5
    $region4: #{tpu_custom_call.1} parent=1 // pred_region
      _
    $region5: #{tpu_custom_call.1} parent=1 // pred_fallthru
      _
    // Predicated region
    $region6: #{tpu_custom_call.1} parent=1 // pred_check
      _
    $region7: #{tpu_custom_call.1} parent=1 // pred_check_branch
      %13 = sbr.rel (0) target = $region9
    $region8: #{tpu_custom_call.1} parent=1 // pred_region
      _
    $region9: #{tpu_custom_call.1} parent=1 // pred_fallthru
      _
    // Predicated region
    $region10: #{tpu_custom_call.1} parent=1 // pred_check
      _
    $region11: #{tpu_custom_call.1} parent=1 // pred_check_branch
      %15 = sbr.rel (0) target = $region13
    $region12: #{tpu_custom_call.1} parent=1 // pred_region
      _
    $region13: #{tpu_custom_call.1} parent=1 // pred_fallthru
      _
    // Predicated region
    $region14: #{tpu_custom_call.1} parent=1 // pred_check
      _
    $region15: #{tpu_custom_call.1} parent=1 // pred_check_branch
      %17 = sbr.rel (0) target = $region17
    $region16: #{tpu_custom_call.1} parent=1 // pred_region
      _
    $region17: #{tpu_custom_call.1} parent=1 // pred_fallthru
      _
    %v19 = vld [vmem:[%s0] sm:$0xff]
    %v20 = vld [vmem:[%s0 + $0x8] sm:$0xff]
    %v21 = vld [vmem:[%s0 + $0x10] sm:$0xff]
    %v22 = vld [vmem:[%s0 + $0x18] sm:$0xff]
    %v23 = vld [vmem:[%s0 + $0x20] sm:$0xff]
    %v24 = vld [vmem:[%s0 + $0x28] sm:$0xff]
    %v25 = vld [vmem:[%s0 + $0x30] sm:$0xff]
    %v26 = vld [vmem:[%s0 + $0x38] sm:$0xff]
    %v27 = vld [vmem:[%s0 + $0x40] sm:$0xff]
    %v28 = vld [vmem:[%s0 + $0x48] sm:$0xff]
    %v29 = vld [vmem:[%s0 + $0x50] sm:$0xff]
    %v30 = vld [vmem:[%s0 + $0x58] sm:$0xff]
    %v31 = vld [vmem:[%s0 + $0x60] sm:$0xff]
    %v32 = vld [vmem:[%s0 + $0x68] sm:$0xff]
    %v33 = vld [vmem:[%s0 + $0x70] sm:$0xff]
    %v34 = vld [vmem:[%s0 + $0x78] sm:$0xff]
    %vm35 = vcmask 261120
    %v36 = vsel %vm35, %v19, 0.0
    %37 = vadd.xlane.f32.xlu0 %v36
    %v38 = vpop.xlane.xlu0 %37
    %v39 = vsel %vm35, %v20, 0.0
    %40 = vadd.xlane.f32.xlu0 %v39
    %v41 = vpop.xlane.xlu0 %40
    %v42 = vsel %vm35, %v21, 0.0
    %43 = vadd.xlane.f32.xlu0 %v42
    %v44 = vpop.xlane.xlu0 %43
    %v45 = vsel %vm35, %v22, 0.0
    %46 = vadd.xlane.f32.xlu0 %v45
    %v47 = vpop.xlane.xlu0 %46
    %v48 = vsel %vm35, %v23, 0.0
    %49 = vadd.xlane.f32.xlu0 %v48
    %v50 = vpop.xlane.xlu0 %49
    %v51 = vsel %vm35, %v24, 0.0
    %52 = vadd.xlane.f32.xlu0 %v51
    %v53 = vpop.xlane.xlu0 %52
    %v54 = vsel %vm35, %v25, 0.0
    %55 = vadd.xlane.f32.xlu0 %v54
    %v56 = vpop.xlane.xlu0 %55
    %v57 = vsel %vm35, %v26, 0.0
    %58 = vadd.xlane.f32.xlu0 %v57
    %v59 = vpop.xlane.xlu0 %58
    %v60 = vsel %vm35, %v27, 0.0
    %61 = vadd.xlane.f32.xlu0 %v60
    %v62 = vpop.xlane.xlu0 %61
    %v63 = vsel %vm35, %v28, 0.0
    %64 = vadd.xlane.f32.xlu0 %v63
    %v65 = vpop.xlane.xlu0 %64
    %v66 = vsel %vm35, %v29, 0.0
    %67 = vadd.xlane.f32.xlu0 %v66
    %v68 = vpop.xlane.xlu0 %67
    %v69 = vsel %vm35, %v30, 0.0
    %70 = vadd.xlane.f32.xlu0 %v69
    %v71 = vpop.xlane.xlu0 %70
    %v72 = vsel %vm35, %v31, 0.0
    %73 = vadd.xlane.f32.xlu0 %v72
    %v74 = vpop.xlane.xlu0 %73
    %v75 = vsel %vm35, %v32, 0.0
    %76 = vadd.xlane.f32.xlu0 %v75
    %v77 = vpop.xlane.xlu0 %76
    %v78 = vsel %vm35, %v33, 0.0
    %79 = vadd.xlane.f32.xlu0 %v78
    %v80 = vpop.xlane.xlu0 %79
    %v81 = vsel %vm35, %v34, 0.0
    %82 = vadd.xlane.f32.xlu0 %v81
    %v83 = vpop.xlane.xlu0 %82
    %v84 = vrcp.pop 32.0
    %v85 = vmul.f32 %v38, %v84
    %v86 = vmul.f32 %v41, %v84
    %v87 = vmul.f32 %v44, %v84
    %v88 = vmul.f32 %v47, %v84
    %v89 = vmul.f32 %v50, %v84
    %v90 = vmul.f32 %v53, %v84
    %v91 = vmul.f32 %v56, %v84
    %v92 = vmul.f32 %v59, %v84
    %v93 = vmul.f32 %v62, %v84
    %v94 = vmul.f32 %v65, %v84
    %v95 = vmul.f32 %v68, %v84
    %v96 = vmul.f32 %v71, %v84
    %v97 = vmul.f32 %v74, %v84
    %v98 = vmul.f32 %v77, %v84
    %v99 = vmul.f32 %v80, %v84
    %v100 = vmul.f32 %v83, %v84
    %v101 = vmul.f32 %v19, %v19
    %v102 = vmul.f32 %v20, %v20
    %v103 = vmul.f32 %v21, %v21
    %v104 = vmul.f32 %v22, %v22
    %v105 = vmul.f32 %v23, %v23
    %v106 = vmul.f32 %v24, %v24
    %v107 = vmul.f32 %v25, %v25
    %v108 = vmul.f32 %v26, %v26
    %v109 = vmul.f32 %v27, %v27
    %v110 = vmul.f32 %v28, %v28
    %v111 = vmul.f32 %v29, %v29
    %v112 = vmul.f32 %v30, %v30
    %v113 = vmul.f32 %v31, %v31
    %v114 = vmul.f32 %v32, %v32
    %v115 = vmul.f32 %v33, %v33
    %v116 = vmul.f32 %v34, %v34
    %v117 = vsel %vm35, %v101, 0.0
    %118 = vadd.xlane.f32.xlu0 %v117
    %v119 = vpop.xlane.xlu0 %118
    %v120 = vsel %vm35, %v102, 0.0
    %121 = vadd.xlane.f32.xlu0 %v120
    %v122 = vpop.xlane.xlu0 %121
    %v123 = vsel %vm35, %v103, 0.0
    %124 = vadd.xlane.f32.xlu0 %v123
    %v125 = vpop.xlane.xlu0 %124
    %v126 = vsel %vm35, %v104, 0.0
    %127 = vadd.xlane.f32.xlu0 %v126
    %v128 = vpop.xlane.xlu0 %127
    %v129 = vsel %vm35, %v105, 0.0
    %130 = vadd.xlane.f32.xlu0 %v129
    %v131 = vpop.xlane.xlu0 %130
    %v132 = vsel %vm35, %v106, 0.0
    %133 = vadd.xlane.f32.xlu0 %v132
    %v134 = vpop.xlane.xlu0 %133
    %v135 = vsel %vm35, %v107, 0.0
    %136 = vadd.xlane.f32.xlu0 %v135
    %v137 = vpop.xlane.xlu0 %136
    %v138 = vsel %vm35, %v108, 0.0
    %139 = vadd.xlane.f32.xlu0 %v138
    %v140 = vpop.xlane.xlu0 %139
    %v141 = vsel %vm35, %v109, 0.0
    %142 = vadd.xlane.f32.xlu0 %v141
    %v143 = vpop.xlane.xlu0 %142
    %v144 = vsel %vm35, %v110, 0.0
    %145 = vadd.xlane.f32.xlu0 %v144
    %v146 = vpop.xlane.xlu0 %145
    %v147 = vsel %vm35, %v111, 0.0
    %148 = vadd.xlane.f32.xlu0 %v147
    %v149 = vpop.xlane.xlu0 %148
    %v150 = vsel %vm35, %v112, 0.0
    %151 = vadd.xlane.f32.xlu0 %v150
    %v152 = vpop.xlane.xlu0 %151
    %v153 = vsel %vm35, %v113, 0.0
    %154 = vadd.xlane.f32.xlu0 %v153
    %v155 = vpop.xlane.xlu0 %154
    %v156 = vsel %vm35, %v114, 0.0
    %157 = vadd.xlane.f32.xlu0 %v156
    %v158 = vpop.xlane.xlu0 %157
    %v159 = vsel %vm35, %v115, 0.0
    %160 = vadd.xlane.f32.xlu0 %v159
    %v161 = vpop.xlane.xlu0 %160
    %v162 = vsel %vm35, %v116, 0.0
    %163 = vadd.xlane.f32.xlu0 %v162
    %v164 = vpop.xlane.xlu0 %163
    %v165 = vmul.f32 %v119, %v84
    %v166 = vmul.f32 %v122, %v84
    %v167 = vmul.f32 %v125, %v84
    %v168 = vmul.f32 %v128, %v84
    %v169 = vmul.f32 %v131, %v84
    %v170 = vmul.f32 %v134, %v84
    %v171 = vmul.f32 %v137, %v84
    %v172 = vmul.f32 %v140, %v84
    %v173 = vmul.f32 %v143, %v84
    %v174 = vmul.f32 %v146, %v84
    %v175 = vmul.f32 %v149, %v84
    %v176 = vmul.f32 %v152, %v84
    %v177 = vmul.f32 %v155, %v84
    %v178 = vmul.f32 %v158, %v84
    %v179 = vmul.f32 %v161, %v84
    %v180 = vmul.f32 %v164, %v84
    %v181 = vmul.f32 %v85, %v85
    %v182 = vmul.f32 %v86, %v86
    %v183 = vmul.f32 %v87, %v87
    %v184 = vmul.f32 %v88, %v88
    %v185 = vmul.f32 %v89, %v89
    %v186 = vmul.f32 %v90, %v90
    %v187 = vmul.f32 %v91, %v91
    %v188 = vmul.f32 %v92, %v92
    %v189 = vmul.f32 %v93, %v93
    %v190 = vmul.f32 %v94, %v94
    %v191 = vmul.f32 %v95, %v95
    %v192 = vmul.f32 %v96, %v96
    %v193 = vmul.f32 %v97, %v97
    %v194 = vmul.f32 %v98, %v98
    %v195 = vmul.f32 %v99, %v99
    %v196 = vmul.f32 %v100, %v100
    %v197 = vsub.f32 %v165, %v181
    %v198 = vsub.f32 %v166, %v182
    %v199 = vsub.f32 %v167, %v183
    %v200 = vsub.f32 %v168, %v184
    %v201 = vsub.f32 %v169, %v185
    %v202 = vsub.f32 %v170, %v186
    %v203 = vsub.f32 %v171, %v187
    %v204 = vsub.f32 %v172, %v188
    %v205 = vsub.f32 %v173, %v189
    %v206 = vsub.f32 %v174, %v190
    %v207 = vsub.f32 %v175, %v191
    %v208 = vsub.f32 %v176, %v192
    %v209 = vsub.f32 %v177, %v193
    %v210 = vsub.f32 %v178, %v194
    %v211 = vsub.f32 %v179, %v195
    %v212 = vsub.f32 %v180, %v196
    %v213 = vmax.f32 %v197, 0.0
    %v214 = vmax.f32 %v198, 0.0
    %v215 = vmax.f32 %v199, 0.0
    %v216 = vmax.f32 %v200, 0.0
    %v217 = vmax.f32 %v201, 0.0
    %v218 = vmax.f32 %v202, 0.0
    %v219 = vmax.f32 %v203, 0.0
    %v220 = vmax.f32 %v204, 0.0
    %v221 = vmax.f32 %v205, 0.0
    %v222 = vmax.f32 %v206, 0.0
    %v223 = vmax.f32 %v207, 0.0
    %v224 = vmax.f32 %v208, 0.0
    %v225 = vmax.f32 %v209, 0.0
    %v226 = vmax.f32 %v210, 0.0
    %v227 = vmax.f32 %v211, 0.0
    %v228 = vmax.f32 %v212, 0.0
    %v229 = vsub.f32 %v19, %v85
    %v230 = vsub.f32 %v20, %v86
    %v231 = vsub.f32 %v21, %v87
    %v232 = vsub.f32 %v22, %v88
    %v233 = vsub.f32 %v23, %v89
    %v234 = vsub.f32 %v24, %v90
    %v235 = vsub.f32 %v25, %v91
    %v236 = vsub.f32 %v26, %v92
    %v237 = vsub.f32 %v27, %v93
    %v238 = vsub.f32 %v28, %v94
    %v239 = vsub.f32 %v29, %v95
    %v240 = vsub.f32 %v30, %v96
    %v241 = vsub.f32 %v31, %v97
    %v242 = vsub.f32 %v32, %v98
    %v243 = vsub.f32 %v33, %v99
    %v244 = vsub.f32 %v34, %v100
    %v245 = vadd.f32 %v213, 1e-05
    %v246 = vadd.f32 %v214, 1e-05
    %v247 = vadd.f32 %v215, 1e-05
    %v248 = vadd.f32 %v216, 1e-05
    %v249 = vadd.f32 %v217, 1e-05
    %v250 = vadd.f32 %v218, 1e-05
    %v251 = vadd.f32 %v219, 1e-05
    %v252 = vadd.f32 %v220, 1e-05
    %v253 = vadd.f32 %v221, 1e-05
    %v254 = vadd.f32 %v222, 1e-05
    %v255 = vadd.f32 %v223, 1e-05
    %v256 = vadd.f32 %v224, 1e-05
    %v257 = vadd.f32 %v225, 1e-05
    %v258 = vadd.f32 %v226, 1e-05
    %v259 = vadd.f32 %v227, 1e-05
    %v260 = vadd.f32 %v228, 1e-05
    %v261 = vrsqrt.pop %v245
    %v262 = vrsqrt.pop %v246
    %v263 = vrsqrt.pop %v247
    %v264 = vrsqrt.pop %v248
    %v265 = vrsqrt.pop %v249
    %v266 = vrsqrt.pop %v250
    %v267 = vrsqrt.pop %v251
    %v268 = vrsqrt.pop %v252
    %v269 = vrsqrt.pop %v253
    %v270 = vrsqrt.pop %v254
    %v271 = vrsqrt.pop %v255
    %v272 = vrsqrt.pop %v256
    %v273 = vrsqrt.pop %v257
    %v274 = vrsqrt.pop %v258
    %v275 = vrsqrt.pop %v259
    %v276 = vrsqrt.pop %v260
    %v277 = vmul.f32 %v229, %v261
    %v278 = vmul.f32 %v230, %v262
    %v279 = vmul.f32 %v231, %v263
    %v280 = vmul.f32 %v232, %v264
    %v281 = vmul.f32 %v233, %v265
    %v282 = vmul.f32 %v234, %v266
    %v283 = vmul.f32 %v235, %v267
    %v284 = vmul.f32 %v236, %v268
    %v285 = vmul.f32 %v237, %v269
    %v286 = vmul.f32 %v238, %v270
    %v287 = vmul.f32 %v239, %v271
    %v288 = vmul.f32 %v240, %v272
    %v289 = vmul.f32 %v241, %v273
    %v290 = vmul.f32 %v242, %v274
    %v291 = vmul.f32 %v243, %v275
    %v292 = vmul.f32 %v244, %v276
    %v293 = vld [vmem:[%s1] sm:$0x1]
    %v295 = vlaneseq
    %v296 = vshrl.u32 %v295, 7
    %v297 = vsub.s32 0, %v296
    %v298 = vrot.slane %v293, %v297
    %v300 = vmul.f32 %v277, %v298
    %v301 = vmul.f32 %v278, %v298
    %v302 = vmul.f32 %v279, %v298
    %v303 = vmul.f32 %v280, %v298
    %v304 = vmul.f32 %v281, %v298
    %v305 = vmul.f32 %v282, %v298
    %v306 = vmul.f32 %v283, %v298
    %v307 = vmul.f32 %v284, %v298
    %v308 = vmul.f32 %v285, %v298
    %v309 = vmul.f32 %v286, %v298
    %v310 = vmul.f32 %v287, %v298
    %v311 = vmul.f32 %v288, %v298
    %v312 = vmul.f32 %v289, %v298
    %v313 = vmul.f32 %v290, %v298
    %v314 = vmul.f32 %v291, %v298
    %v315 = vmul.f32 %v292, %v298
    %v316 = vld [vmem:[%s2] sm:$0x1]
    %v318 = vlaneseq
    %v319 = vshrl.u32 %v318, 7
    %v320 = vsub.s32 0, %v319
    %v321 = vrot.slane %v316, %v320
    %v323 = vadd.f32 %v300, %v321
    %v324 = vadd.f32 %v301, %v321
    %v325 = vadd.f32 %v302, %v321
    %v326 = vadd.f32 %v303, %v321
    %v327 = vadd.f32 %v304, %v321
    %v328 = vadd.f32 %v305, %v321
    %v329 = vadd.f32 %v306, %v321
    %v330 = vadd.f32 %v307, %v321
    %v331 = vadd.f32 %v308, %v321
    %v332 = vadd.f32 %v309, %v321
    %v333 = vadd.f32 %v310, %v321
    %v334 = vadd.f32 %v311, %v321
    %v335 = vadd.f32 %v312, %v321
    %v336 = vadd.f32 %v313, %v321
    %v337 = vadd.f32 %v314, %v321
    %v338 = vadd.f32 %v315, %v321
    %v339 = vpack.c.bf16 %v324, %v323
    %v340 = vpack.c.bf16 %v326, %v325
    %v341 = vpack.c.bf16 %v328, %v327
    %v342 = vpack.c.bf16 %v330, %v329
    %v343 = vpack.c.bf16 %v332, %v331
    %v344 = vpack.c.bf16 %v334, %v333
    %v345 = vpack.c.bf16 %v336, %v335
    %v346 = vpack.c.bf16 %v338, %v337
    %v347 = vld [vmem:[%s3] sm:$0xf]
    %v348 = vld [vmem:[%s3 + $0x4] sm:$0xf]
    %v349 = vld [vmem:[%s3 + $0x8] sm:$0xf]
    %v350 = vld [vmem:[%s3 + $0xc] sm:$0xf]
    %v355 = vunpack.c.l.b16 %v347
    %v356 = vunpack.c.l.b16 %v348
    %v357 = vunpack.c.l.b16 %v349
    %v358 = vunpack.c.l.b16 %v350
    %v359 = vpack.c.b16 %v356, %v355
    %v360 = vpack.c.b16 %v358, %v357
    %v364 = vsel %vm35, %v339, 0
    %v367 = vsel %vm35, %v340, 0
    %v370 = vsel %vm35, %v341, 0
    %v373 = vsel %vm35, %v342, 0
    %v376 = vsel %vm35, %v343, 0
    %v379 = vsel %vm35, %v344, 0
    %v382 = vsel %vm35, %v345, 0
    %v385 = vsel %vm35, %v346, 0
    %387 = vmatprep.subr.bf16.mxu0 0
    %388 = vmatpush1.bf16.msra.mxu0 0
    %389 = vmatprep.subr.bf16.mxu0 0
    %390 = vmatpush1.bf16.msra.mxu0 0
    %391 = vmatprep.subr.bf16.mxu0 0
    %392 = vmatpush1.bf16.msra.mxu0 0
    %393 = vmatprep.subr.bf16.mxu0 0
    %394 = vmatpush1.bf16.msra.mxu0 0
    %395 = vmatprep.subr.bf16.mxu0 0
    %396 = vmatpush1.bf16.msra.mxu0 0
    %397 = vmatprep.subr.bf16.mxu0 0
    %398 = vmatpush1.bf16.msra.mxu0 0
    %399 = vmatprep.subr.bf16.mxu0 0
    %400 = vmatpush1.bf16.msra.mxu0 %v360
    %401 = vmatprep.subr.bf16.mxu0 0
    %402 = vmatpush1.bf16.msra.mxu0 %v359
    %403 = vmatprep.subr.bf16.mxu0 0
    %404 = vmatpush2.bf16.msra.mxu0 0
    %405 = vmatprep.subr.bf16.mxu0 0
    %406 = vmatpush2.bf16.msra.mxu0 0
    %407 = vmatprep.subr.bf16.mxu0 0
    %408 = vmatpush2.bf16.msra.mxu0 0
    %409 = vmatprep.subr.bf16.mxu0 0
    %410 = vmatpush2.bf16.msra.mxu0 0
    %411 = vmatprep.subr.bf16.mxu0 0
    %412 = vmatpush2.bf16.msra.mxu0 0
    %413 = vmatprep.subr.bf16.mxu0 0
    %414 = vmatpush2.bf16.msra.mxu0 0
    %415 = vmatprep.subr.bf16.mxu0 0
    %416 = vmatpush2.bf16.msra.mxu0 0
    %417 = vmatprep.subr.bf16.mxu0 0
    %418 = vmatpush2.bf16.msra.mxu0 0
    %419 = vmatprep.mubr.bf16.mxu0 0
    %420 = vmatmul.mubr.bf16.gmra.mxu0 %v364
    %v421 = vpop.f32.mrf.mxu0
    %v422 = vadd.f32 0.0, %v421
    %v423 = vpop.f32.mrf.mxu0
    %v424 = vpop.f32.mrf.mxu0
    %v425 = vadd.f32 0.0, %v424
    %v426 = vpop.f32.mrf.mxu0
    %427 = vmatprep.mubr.bf16.mxu0 0
    %428 = vmatmul.mubr.bf16.gmra.mxu0 %v367
    %v429 = vpop.f32.mrf.mxu0
    %v430 = vadd.f32 0.0, %v429
    %v431 = vpop.f32.mrf.mxu0
    %v432 = vpop.f32.mrf.mxu0
    %v433 = vadd.f32 0.0, %v432
    %v434 = vpop.f32.mrf.mxu0
    %435 = vmatprep.mubr.bf16.mxu0 0
    %436 = vmatmul.mubr.bf16.gmra.mxu0 %v370
    %v437 = vpop.f32.mrf.mxu0
    %v438 = vadd.f32 0.0, %v437
    %v439 = vpop.f32.mrf.mxu0
    %v440 = vpop.f32.mrf.mxu0
    %v441 = vadd.f32 0.0, %v440
    %v442 = vpop.f32.mrf.mxu0
    %443 = vmatprep.mubr.bf16.mxu0 0
    %444 = vmatmul.mubr.bf16.gmra.mxu0 %v373
    %v445 = vpop.f32.mrf.mxu0
    %v446 = vadd.f32 0.0, %v445
    %v447 = vpop.f32.mrf.mxu0
    %v448 = vpop.f32.mrf.mxu0
    %v449 = vadd.f32 0.0, %v448
    %v450 = vpop.f32.mrf.mxu0
    %451 = vmatprep.mubr.bf16.mxu0 0
    %452 = vmatmul.mubr.bf16.gmra.mxu0 %v376
    %v453 = vpop.f32.mrf.mxu0
    %v454 = vadd.f32 0.0, %v453
    %v455 = vpop.f32.mrf.mxu0
    %v456 = vpop.f32.mrf.mxu0
    %v457 = vadd.f32 0.0, %v456
    %v458 = vpop.f32.mrf.mxu0
    %459 = vmatprep.mubr.bf16.mxu0 0
    %460 = vmatmul.mubr.bf16.gmra.mxu0 %v379
    %v461 = vpop.f32.mrf.mxu0
    %v462 = vadd.f32 0.0, %v461
    %v463 = vpop.f32.mrf.mxu0
    %v464 = vpop.f32.mrf.mxu0
    %v465 = vadd.f32 0.0, %v464
    %v466 = vpop.f32.mrf.mxu0
    %467 = vmatprep.mubr.bf16.mxu0 0
    %468 = vmatmul.mubr.bf16.gmra.mxu0 %v382
    %v469 = vpop.f32.mrf.mxu0
    %v470 = vadd.f32 0.0, %v469
    %v471 = vpop.f32.mrf.mxu0
    %v472 = vpop.f32.mrf.mxu0
    %v473 = vadd.f32 0.0, %v472
    %v474 = vpop.f32.mrf.mxu0
    %475 = vmatprep.mubr.bf16.mxu0 0
    %476 = vmatmul.mubr.bf16.gmra.mxu0 %v385
    %v477 = vpop.f32.mrf.mxu0
    %v478 = vadd.f32 0.0, %v477
    %v479 = vpop.f32.mrf.mxu0
    %v480 = vpop.f32.mrf.mxu0
    %v481 = vadd.f32 0.0, %v480
    %v482 = vpop.f32.mrf.mxu0
    %483 = vdwg.mxu0
    %484 = vst.msk [vmem:[#allocation2] sm:$0xff] %vm35, %v422
    %485 = vst.msk [vmem:[#allocation2 + $0x10] sm:$0xff] %vm35, %v425
    %486 = vst.msk [vmem:[#allocation2 + $0x20] sm:$0xff] %vm35, %v430
    %487 = vst.msk [vmem:[#allocation2 + $0x30] sm:$0xff] %vm35, %v433
    %488 = vst.msk [vmem:[#allocation2 + $0x40] sm:$0xff] %vm35, %v438
    %489 = vst.msk [vmem:[#allocation2 + $0x50] sm:$0xff] %vm35, %v441
    %490 = vst.msk [vmem:[#allocation2 + $0x60] sm:$0xff] %vm35, %v446
    %491 = vst.msk [vmem:[#allocation2 + $0x70] sm:$0xff] %vm35, %v449
    %492 = vst.msk [vmem:[#allocation2 + $0x80] sm:$0xff] %vm35, %v454
    %493 = vst.msk [vmem:[#allocation2 + $0x90] sm:$0xff] %vm35, %v457
    %494 = vst.msk [vmem:[#allocation2 + $0xa0] sm:$0xff] %vm35, %v462
    %495 = vst.msk [vmem:[#allocation2 + $0xb0] sm:$0xff] %vm35, %v465
    %496 = vst.msk [vmem:[#allocation2 + $0xc0] sm:$0xff] %vm35, %v470
    %497 = vst.msk [vmem:[#allocation2 + $0xd0] sm:$0xff] %vm35, %v473
    %498 = vst.msk [vmem:[#allocation2 + $0xe0] sm:$0xff] %vm35, %v478
    %499 = vst.msk [vmem:[#allocation2 + $0xf0] sm:$0xff] %vm35, %v481
    %516 = vrot.lane.b32.xlu0 %v422, 96
    %v517 = vpop.permute.xlu0 %516
    %518 = vrot.lane.b32.xlu0 %v425, 96
    %v519 = vpop.permute.xlu0 %518
    %520 = vrot.lane.b32.xlu0 %v430, 96
    %v521 = vpop.permute.xlu0 %520
    %522 = vrot.lane.b32.xlu0 %v433, 96
    %v523 = vpop.permute.xlu0 %522
    %524 = vrot.lane.b32.xlu0 %v438, 96
    %v525 = vpop.permute.xlu0 %524
    %526 = vrot.lane.b32.xlu0 %v441, 96
    %v527 = vpop.permute.xlu0 %526
    %528 = vrot.lane.b32.xlu0 %v446, 96
    %v529 = vpop.permute.xlu0 %528
    %530 = vrot.lane.b32.xlu0 %v449, 96
    %v531 = vpop.permute.xlu0 %530
    %532 = vrot.lane.b32.xlu0 %v454, 96
    %v533 = vpop.permute.xlu0 %532
    %534 = vrot.lane.b32.xlu0 %v457, 96
    %v535 = vpop.permute.xlu0 %534
    %536 = vrot.lane.b32.xlu0 %v462, 96
    %v537 = vpop.permute.xlu0 %536
    %538 = vrot.lane.b32.xlu0 %v465, 96
    %v539 = vpop.permute.xlu0 %538
    %540 = vrot.lane.b32.xlu0 %v470, 96
    %v541 = vpop.permute.xlu0 %540
    %542 = vrot.lane.b32.xlu0 %v473, 96
    %v543 = vpop.permute.xlu0 %542
    %544 = vrot.lane.b32.xlu0 %v478, 96
    %v545 = vpop.permute.xlu0 %544
    %546 = vrot.lane.b32.xlu0 %v481, 96
    %v547 = vpop.permute.xlu0 %546
    %s564 = scalar_lea.vmem [#allocation2], 8
    %565 = vst.msk [vmem:[%s564] sm:$0xff] %vm35, %v517
    %566 = vst.msk [vmem:[%s564 + $0x10] sm:$0xff] %vm35, %v519
    %567 = vst.msk [vmem:[%s564 + $0x20] sm:$0xff] %vm35, %v521
    %568 = vst.msk [vmem:[%s564 + $0x30] sm:$0xff] %vm35, %v523
    %569 = vst.msk [vmem:[%s564 + $0x40] sm:$0xff] %vm35, %v525
    %570 = vst.msk [vmem:[%s564 + $0x50] sm:$0xff] %vm35, %v527
    %571 = vst.msk [vmem:[%s564 + $0x60] sm:$0xff] %vm35, %v529
    %572 = vst.msk [vmem:[%s564 + $0x70] sm:$0xff] %vm35, %v531
    %573 = vst.msk [vmem:[%s564 + $0x80] sm:$0xff] %vm35, %v533
    %574 = vst.msk [vmem:[%s564 + $0x90] sm:$0xff] %vm35, %v535
    %575 = vst.msk [vmem:[%s564 + $0xa0] sm:$0xff] %vm35, %v537
    %576 = vst.msk [vmem:[%s564 + $0xb0] sm:$0xff] %vm35, %v539
    %577 = vst.msk [vmem:[%s564 + $0xc0] sm:$0xff] %vm35, %v541
    %578 = vst.msk [vmem:[%s564 + $0xd0] sm:$0xff] %vm35, %v543
    %579 = vst.msk [vmem:[%s564 + $0xe0] sm:$0xff] %vm35, %v545
    %580 = vst.msk [vmem:[%s564 + $0xf0] sm:$0xff] %vm35, %v547
    // Predicated region
    $region18: #{tpu_custom_call.1} parent=1 // pred_check
      _
    $region19: #{tpu_custom_call.1} parent=1 // pred_check_branch
      %582 = sbr.rel (0) target = $region21
    $region20: #{tpu_custom_call.1} parent=1 // pred_region
      %s584 = ssub.s32 4096, 4096
      %585 = vsyncadd [#allocation3], %s584
      %s586 = sshll.u32 [#allocation2], 4
      %s587 = int_to_ptr.vmem [resolvable:$true] %s586
      %592 = dma.vmem_to_hbm [thread:$0]  %s587, 4096, %s4, [#allocation3], 128, 128, 8
    $region21: #{tpu_custom_call.1} parent=1 // pred_fallthru
      _
    // Predicated region
    $region22: #{tpu_custom_call.1} parent=1 // pred_check
      _
    $region23: #{tpu_custom_call.1} parent=1 // pred_check_branch
      %594 = sbr.rel (0) target = $region25
    $region24: #{tpu_custom_call.1} parent=1 // pred_region
      %595 = dma.done [#allocation3], 4096
    $region25: #{tpu_custom_call.1} parent=1 // pred_fallthru
      _
    %596 = vsyncpa [#allocation3], 1

</llo_original>
